<compile_context>
chip_gen: v7x
topology: tpu7x:2x2x1
jax: 0.10.0
libtpu: 0.0.40
codegen_flags: <defaults>
</compile_context>

<pallas_src>
import jax
import jax.numpy as jnp
from jax.experimental import pallas as pl
from jax.experimental.pallas import tpu as pltpu


def _outconv_kernel(x_ref, w_ref, b_ref, o_ref):
    # x_ref: (1, C_in, TS)   spatial axis in the lane dim  -> lane-dense loads
    # w_ref: (C_out, C_in)   tiny, VMEM-resident (constant index_map)
    # b_ref: (C_out, 1)
    # o_ref: (1, C_out, TS)  spatial axis in the lane dim  -> lane-dense stores
    x = x_ref[0]                       # (C_in, TS)
    w = w_ref[...]                     # (C_out, C_in)
    c_out, c_in = w.shape

    if c_in <= 8 and c_out <= 8:
        # Tiny channel counts: contraction on the VPU as unrolled broadcast
        # FMAs (column of W broadcast along lanes, row of x broadcast along
        # sublanes) instead of a near-empty MXU matmul.
        xf = x.astype(jnp.float32)
        wf = w.astype(jnp.float32)
        acc = wf[:, 0:1] * xf[0:1, :]                  # (C_out, TS)
        for c in range(1, c_in):
            acc = acc + wf[:, c:c + 1] * xf[c:c + 1, :]
    else:
        # Larger channel counts: use the MXU.
        acc = jnp.dot(w, x, preferred_element_type=jnp.float32)

    o_ref[0] = (acc + b_ref[...].astype(jnp.float32)).astype(o_ref.dtype)


def _spatial_tile(hw, n_chan_rows, itemsize, budget_bytes=8 * 1024 * 1024):
    """Pick the spatial tile TS.

    Constraints: TS == hw, or (TS % 128 == 0 and hw % TS == 0) so the grid
    divides evenly (no padding) and the BlockSpec (8,128) rule is satisfied.
    TS is capped so double-buffered (in + out) blocks stay within budget
    (safe for v7x's smaller VMEM and v5e's lower scoped default).
    Returns (ts, padded_hw).
    """
    max_ts = max(128, budget_bytes // (2 * n_chan_rows * itemsize))
    if hw <= max_ts:
        return hw, hw
    ts = (min(max_ts, hw) // 128) * 128
    while ts >= 128:
        if hw % ts == 0:
            return ts, hw
        ts -= 128
    # Rare fallback: no 128-aligned divisor under budget -> minimal padding.
    ts = max(128, (max_ts // 128) * 128)
    return ts, pl.cdiv(hw, ts) * ts


def outconv_forward(x, weight, bias):
    """Forward of nn.Conv2d(in_channels, out_channels, kernel_size=1).

    x:      (N, C_in, H, W)
    weight: (C_out, C_in, 1, 1)
    bias:   (C_out,)
    returns (N, C_out, H, W)
    """
    N, C_in, H, W = x.shape
    C_out = weight.shape[0]
    HW = H * W

    # Free reshapes only -- no NCHW<->NHWC transposes.
    x3 = x.reshape(N, C_in, HW)
    w2 = weight.reshape(C_out, C_in)
    b2 = bias.reshape(C_out, 1)

    ts, hw_pad = _spatial_tile(HW, C_in + C_out, x.dtype.itemsize)
    if hw_pad != HW:
        # Only hit for awkward H*W with no 128-aligned divisor under budget.
        x3 = jnp.pad(x3, ((0, 0), (0, 0), (0, hw_pad - HW)))

    grid = (N, hw_pad // ts)

    out3 = pl.pallas_call(
        _outconv_kernel,
        out_shape=jax.ShapeDtypeStruct((N, C_out, hw_pad), x.dtype),
        grid=grid,
        in_specs=[
            pl.BlockSpec((1, C_in, ts), lambda n, s: (n, 0, s)),
            pl.BlockSpec((C_out, C_in), lambda n, s: (0, 0)),   # VMEM-resident
            pl.BlockSpec((C_out, 1), lambda n, s: (0, 0)),      # VMEM-resident
        ],
        out_specs=pl.BlockSpec((1, C_out, ts), lambda n, s: (n, 0, s)),
        compiler_params=pltpu.CompilerParams(
            dimension_semantics=("parallel", "parallel"),  # shards across v7x's 2 TCs
            vmem_limit_bytes=32 * 1024 * 1024,
        ),
    )(x3, w2, b2)

    if hw_pad != HW:
        out3 = out3[:, :, :HW]
    return out3.reshape(N, C_out, H, W)


if __name__ == "__main__":
    key = jax.random.PRNGKey(0)
    kx, kw, kb = jax.random.split(key, 3)

    N, C_in, C_out, H, W = 2, 4, 3, 16, 16
    x = jax.random.normal(kx, (N, C_in, H, W), dtype=jnp.float32)
    weight = jax.random.normal(kw, (C_out, C_in, 1, 1), dtype=jnp.float32) * 0.1
    bias = jax.random.normal(kb, (C_out,), dtype=jnp.float32) * 0.1

    out = outconv_forward(x, weight, bias)
    jax.block_until_ready(out)

    # Reference: same math as PyTorch 1x1 conv.
    ref = jnp.einsum("nchw,oc->nohw", x, weight.reshape(C_out, C_in)) \
        + bias[None, :, None, None]
    assert out.shape == (N, C_out, H, W)
    assert jnp.allclose(out, ref, atol=1e-5), "mismatch vs reference"

    print("KERNEL_OK")
</pallas_src>

<mosaic_0001>
module attributes {stable_mosaic.version = 11 : i64} {
  func.func @_outconv_kernel(%arg0: i32, %arg1: i32, %arg2: memref<1x4x256xf32, #tpu.memory_space<vmem>>, %arg3: memref<3x4xf32, #tpu.memory_space<vmem>>, %arg4: memref<3x1xf32, #tpu.memory_space<vmem>>, %arg5: memref<1x3x256xf32, #tpu.memory_space<vmem>>) attributes {dimension_semantics = [#tpu.dimension_semantics<parallel>, #tpu.dimension_semantics<parallel>], iteration_bounds = array<i64: 2, 1>, scalar_prefetch = 0 : i64, scratch_operands = 0 : i64, tpu.core_type = #tpu.core_type<tc>, window_params = [{transform_indices = @transform_0, window_bounds = array<i64: 1, 4, 256>}, {pipeline_mode = #tpu.pipeline_mode<synchronous>, transform_indices = @transform_1, window_bounds = array<i64: 3, 4>}, {pipeline_mode = #tpu.pipeline_mode<synchronous>, transform_indices = @transform_2, window_bounds = array<i64: 3, 1>}, {transform_indices = @transform_3, window_bounds = array<i64: 1, 3, 256>}]} {
    %c0 = arith.constant 0 : index
    %c0_0 = arith.constant 0 : index
    %c0_1 = arith.constant 0 : index
    %0 = vector.load %arg2[%c0, %c0_0, %c0_1] : memref<1x4x256xf32, #tpu.memory_space<vmem>>, vector<1x4x256xf32>
    %1 = vector.shape_cast %0 : vector<1x4x256xf32> to vector<4x256xf32>
    %c0_2 = arith.constant 0 : index
    %c0_3 = arith.constant 0 : index
    %2 = vector.load %arg3[%c0_2, %c0_3] : memref<3x4xf32, #tpu.memory_space<vmem>>, vector<3x4xf32>
    %3 = vector.extract_strided_slice %2 {offsets = [0, 0], sizes = [3, 1], strides = [1, 1]} : vector<3x4xf32> to vector<3x1xf32>
    %4 = vector.extract_strided_slice %1 {offsets = [0, 0], sizes = [1, 256], strides = [1, 1]} : vector<4x256xf32> to vector<1x256xf32>
    %5 = vector.broadcast %3 : vector<3x1xf32> to vector<3x256xf32>
    %6 = vector.broadcast %4 : vector<1x256xf32> to vector<3x256xf32>
    %7 = arith.mulf %5, %6 : vector<3x256xf32>
    %8 = vector.extract_strided_slice %2 {offsets = [0, 1], sizes = [3, 1], strides = [1, 1]} : vector<3x4xf32> to vector<3x1xf32>
    %9 = vector.extract_strided_slice %1 {offsets = [1, 0], sizes = [1, 256], strides = [1, 1]} : vector<4x256xf32> to vector<1x256xf32>
    %10 = vector.broadcast %8 : vector<3x1xf32> to vector<3x256xf32>
    %11 = vector.broadcast %9 : vector<1x256xf32> to vector<3x256xf32>
    %12 = arith.mulf %10, %11 : vector<3x256xf32>
    %13 = arith.addf %7, %12 : vector<3x256xf32>
    %14 = vector.extract_strided_slice %2 {offsets = [0, 2], sizes = [3, 1], strides = [1, 1]} : vector<3x4xf32> to vector<3x1xf32>
    %15 = vector.extract_strided_slice %1 {offsets = [2, 0], sizes = [1, 256], strides = [1, 1]} : vector<4x256xf32> to vector<1x256xf32>
    %16 = vector.broadcast %14 : vector<3x1xf32> to vector<3x256xf32>
    %17 = vector.broadcast %15 : vector<1x256xf32> to vector<3x256xf32>
    %18 = arith.mulf %16, %17 : vector<3x256xf32>
    %19 = arith.addf %13, %18 : vector<3x256xf32>
    %20 = vector.extract_strided_slice %2 {offsets = [0, 3], sizes = [3, 1], strides = [1, 1]} : vector<3x4xf32> to vector<3x1xf32>
    %21 = vector.extract_strided_slice %1 {offsets = [3, 0], sizes = [1, 256], strides = [1, 1]} : vector<4x256xf32> to vector<1x256xf32>
    %22 = vector.broadcast %20 : vector<3x1xf32> to vector<3x256xf32>
    %23 = vector.broadcast %21 : vector<1x256xf32> to vector<3x256xf32>
    %24 = arith.mulf %22, %23 : vector<3x256xf32>
    %25 = arith.addf %19, %24 : vector<3x256xf32>
    %c0_4 = arith.constant 0 : index
    %c0_5 = arith.constant 0 : index
    %26 = vector.load %arg4[%c0_4, %c0_5] : memref<3x1xf32, #tpu.memory_space<vmem>>, vector<3x1xf32>
    %27 = vector.broadcast %26 : vector<3x1xf32> to vector<3x256xf32>
    %28 = arith.addf %25, %27 : vector<3x256xf32>
    %c0_6 = arith.constant 0 : index
    %c0_7 = arith.constant 0 : index
    %c0_8 = arith.constant 0 : index
    %29 = vector.load %arg5[%c0_6, %c0_7, %c0_8] : memref<1x3x256xf32, #tpu.memory_space<vmem>>, vector<1x3x256xf32>
    %30 = vector.shape_cast %29 : vector<1x3x256xf32> to vector<3x256xf32>
    %31 = vector.shape_cast %28 : vector<3x256xf32> to vector<1x3x256xf32>
    tpu.vector_store %arg5[%c0_6, %c0_7, %c0_8], %31 {strides = array<i32>} : memref<1x3x256xf32, #tpu.memory_space<vmem>>, vector<1x3x256xf32>,
    return
  }
  func.func @transform_0(%arg0: i32, %arg1: i32) -> (i32, i32, i32) {
    %c0_i32 = arith.constant 0 : i32
    %c0_i32_0 = arith.constant 0 : i32
    return %arg0, %c0_i32, %arg1 : i32, i32, i32
  }
  func.func @transform_1(%arg0: i32, %arg1: i32) -> (i32, i32) {
    %c0_i32 = arith.constant 0 : i32
    %c0_i32_0 = arith.constant 0 : i32
    %c0_i32_1 = arith.constant 0 : i32
    return %c0_i32, %c0_i32_0 : i32, i32
  }
  func.func @transform_2(%arg0: i32, %arg1: i32) -> (i32, i32) {
    %c0_i32 = arith.constant 0 : i32
    %c0_i32_0 = arith.constant 0 : i32
    %c0_i32_1 = arith.constant 0 : i32
    return %c0_i32, %c0_i32_0 : i32, i32
  }
  func.func @transform_3(%arg0: i32, %arg1: i32) -> (i32, i32, i32) {
    %c0_i32 = arith.constant 0 : i32
    %c0_i32_0 = arith.constant 0 : i32
    return %arg0, %c0_i32, %arg1 : i32, i32, i32
  }
}

</mosaic_0001>

<llo_original>
// kernel: tpu_custom_call.1
$region0: #{tpu_custom_call.1}
  #allocation0 [shape = 'u32[]', space=smem, size = 0x4, offset = 0x4, fixed_abs, tag = 'smem constant byte address 0x4 - core index']
  #allocation1 [shape = 'u32[144,128]{1,0:T(1,128)}', space=vmem, size = 0x12000, scoped, tag = 'internal scratch']
  %s0 = inlined_call_operand.hbm [shape: f32[2,4,256], index: 0, kind: input, shape index: {}]
  %s1 = inlined_call_operand.vmem [shape: f32[3,4], index: 1, kind: input, shape index: {}]
  %s2 = inlined_call_operand.vmem [shape: f32[3,1], index: 2, kind: input, shape index: {}]
  %s3 = inlined_call_operand.vmem [shape: f32[2,3,256], index: 3, kind: output, shape index: {}]
  %s4 = sld [smem:[#allocation0]]
  $region49: #{tpu_custom_call.1} parent=0
    _
  %s6 = ssub.s32 1, %s4
  %s7 = scalar_select 0, %s6, %s4
  $region1: #{tpu_custom_call.1} parent=0
    #allocation2 [shape = 'u8[8192]{0}', space=vmem, size = 0x2000, scoped, tag = 'input window, operand 0']
    #allocation3 [shape = 's32[2]{0}', space=sflag, size = 0x8, scoped, tag = 'scoped memory for tpu_custom_call.1']
    %8 = vsyncpa [#allocation3], 0
    %s9 = scalar_lea.sflag [#allocation3], 1
    %10 = vsyncpa %s9, 0
    loop: start=0, step=1, limit=4
    $region2: #{tpu_custom_call.1} parent=1 // loop_pre_header
      _
    $region3: #{tpu_custom_call.1} parent=1 // loop_header
      %s12 = sphi 0, %s16
      %p13 = scmp.ge.s32.totalorder %s12, 4
      %s19 = sphi 0, %s31
      %s20 = sphi 0, %s27
      %s21 = sphi 0, %s19
      %s22 = sphi 0, %s20
      %s23 = sphi 0, %s21
      %s24 = sphi 0, %s22
      %s36 = sphi 0, %s38
      %s39 = sphi 0, %s36
      %s40 = sphi 0, %s39
      %s56 = sphi 0, %s40
      %s60 = sphi 0, %s60
      %s62 = sphi 0, %s60
      %s63 = sphi 0, %s62
      %s77 = sphi 0, %s63
      %s81 = sphi 0, %s81
      %s83 = sphi 0, %s81
      %s84 = sphi 0, %s83
      %s98 = sphi 0, %s84
      %s106 = sphi 0, %s108
      %s109 = sphi 0, %s106
      %s110 = sphi 0, %s109
      %s126 = sphi 0, %s110
    $region4: #{tpu_custom_call.1} parent=1 // loop_header_branch
      %15 = sbr.rel (%p13) target = $region8
    $region5: #{tpu_custom_call.1} parent=1 // loop_body
      %s17 = ssub.s32 %s12, 1
      %s18 = ssub.s32 %s12, 2
      %s25 = sadd.s32 1, %s20
      %p26 = scmp.ge.s32.totalorder %s25, 1
      %s27 = scalar_select %p26, 0, %s25
      %s28 = sadd.s32 1, %s19
      %s29 = scalar_select %p26, %s28, %s19
      %p30 = scmp.ge.s32.totalorder %s29, 2
      %s31 = scalar_select %p30, 0, %s29
      %s32 = ssub.s32 %s19, %s31
      %s33 = ssub.s32 %s20, %s27
      %s34 = sor.u32 %s32, %s33
      %p35 = scmp.eq.s32.totalorder %s34, 0
      %s37 = sadd.s32 %s36, 1
      %s38 = scalar_select %p35, %s36, %s37
      %p41 = pneg %p35
      %p42 = scmp.eq.s32.totalorder %s12, 1
      %p43 = por %p41, %p42
      %p44 = scmp.ne.s32.totalorder %s36, %s39
      %p45 = scmp.eq.s32.totalorder %s12, 0
      %p46 = por %p44, %p45
      %p47 = scmp.ne.s32.totalorder %s36, %s39
      %p48 = scmp.eq.s32.totalorder %s17, 1
      %p49 = por %p47, %p48
      %p50 = scmp.ne.s32.totalorder %s39, %s40
      %p51 = scmp.eq.s32.totalorder %s17, 0
      %p52 = por %p50, %p51
      %p53 = scmp.ne.s32.totalorder %s39, %s40
      %p54 = scmp.eq.s32.totalorder %s18, 1
      %p55 = por %p53, %p54
      %p57 = scmp.ne.s32.totalorder %s40, %s56
      %p58 = scmp.eq.s32.totalorder %s18, 0
      %p59 = por %p57, %p58
      %s61 = sadd.s32 %s60, 1
      %p64 = scmp.eq.s32.totalorder %s12, 1
      %p65 = scmp.ne.s32.totalorder %s60, %s62
      %p66 = scmp.eq.s32.totalorder %s12, 0
      %p67 = por %p65, %p66
      %p68 = scmp.ne.s32.totalorder %s60, %s62
      %p69 = scmp.eq.s32.totalorder %s17, 1
      %p70 = por %p68, %p69
      %p71 = scmp.ne.s32.totalorder %s62, %s63
      %p72 = scmp.eq.s32.totalorder %s17, 0
      %p73 = por %p71, %p72
      %p74 = scmp.ne.s32.totalorder %s62, %s63
      %p75 = scmp.eq.s32.totalorder %s18, 1
      %p76 = por %p74, %p75
      %p78 = scmp.ne.s32.totalorder %s63, %s77
      %p79 = scmp.eq.s32.totalorder %s18, 0
      %p80 = por %p78, %p79
      %s82 = sadd.s32 %s81, 1
      %p85 = scmp.eq.s32.totalorder %s12, 1
      %p86 = scmp.ne.s32.totalorder %s81, %s83
      %p87 = scmp.eq.s32.totalorder %s12, 0
      %p88 = por %p86, %p87
      %p89 = scmp.ne.s32.totalorder %s81, %s83
      %p90 = scmp.eq.s32.totalorder %s17, 1
      %p91 = por %p89, %p90
      %p92 = scmp.ne.s32.totalorder %s83, %s84
      %p93 = scmp.eq.s32.totalorder %s17, 0
      %p94 = por %p92, %p93
      %p95 = scmp.ne.s32.totalorder %s83, %s84
      %p96 = scmp.eq.s32.totalorder %s18, 1
      %p97 = por %p95, %p96
      %p99 = scmp.ne.s32.totalorder %s84, %s98
      %p100 = scmp.eq.s32.totalorder %s18, 0
      %p101 = por %p99, %p100
      %s102 = ssub.s32 %s19, %s31
      %s103 = ssub.s32 %s20, %s27
      %s104 = sor.u32 %s102, %s103
      %p105 = scmp.eq.s32.totalorder %s104, 0
      %s107 = sadd.s32 %s106, 1
      %s108 = scalar_select %p105, %s106, %s107
      %p111 = pneg %p105
      %p112 = scmp.eq.s32.totalorder %s12, 1
      %p113 = por %p111, %p112
      %p114 = scmp.ne.s32.totalorder %s106, %s109
      %p115 = scmp.eq.s32.totalorder %s12, 0
      %p116 = por %p114, %p115
      %p117 = scmp.ne.s32.totalorder %s106, %s109
      %p118 = scmp.eq.s32.totalorder %s17, 1
      %p119 = por %p117, %p118
      %p120 = scmp.ne.s32.totalorder %s109, %s110
      %p121 = scmp.eq.s32.totalorder %s17, 0
      %p122 = por %p120, %p121
      %p123 = scmp.ne.s32.totalorder %s109, %s110
      %p124 = scmp.eq.s32.totalorder %s18, 1
      %p125 = por %p123, %p124
      %p127 = scmp.ne.s32.totalorder %s110, %s126
      %p128 = scmp.eq.s32.totalorder %s18, 0
      %p129 = por %p127, %p128
      %p130 = scmp.le.s32.totalorder 1, %s12
      %p131 = scmp.lt.s32.totalorder %s12, 3
      %p132 = pnand %p130, %p131
      %p133 = pneg %p132
      // Predicated region
      $region9: #{tpu_custom_call.1} parent=5 // pred_check
        _
      $region10: #{tpu_custom_call.1} parent=5 // pred_check_branch
        %135 = sbr.rel (%p132) target = $region12
      $region11: #{tpu_custom_call.1} parent=5 // pred_region
        %s136 = ssub.s32 %s12, 1
        // Predicated region
        $region13: #{tpu_custom_call.1} parent=11 // pred_check
          %p137 = pneg %p73
        $region14: #{tpu_custom_call.1} parent=11 // pred_check_branch
          %139 = sbr.rel (%p137) target = $region16
        $region15: #{tpu_custom_call.1} parent=11 // pred_region
          _
        $region16: #{tpu_custom_call.1} parent=11 // pred_fallthru
          _
        // Predicated region
        $region17: #{tpu_custom_call.1} parent=11 // pred_check
          %p140 = pneg %p94
        $region18: #{tpu_custom_call.1} parent=11 // pred_check_branch
          %142 = sbr.rel (%p140) target = $region20
        $region19: #{tpu_custom_call.1} parent=11 // pred_region
          _
        $region20: #{tpu_custom_call.1} parent=11 // pred_fallthru
          _
      $region12: #{tpu_custom_call.1} parent=5 // pred_fallthru
        _
      %p143 = scmp.lt.s32.totalorder %s12, 2
      // Predicated region
      $region21: #{tpu_custom_call.1} parent=5 // pred_check
        %p144 = pneg %p143
      $region22: #{tpu_custom_call.1} parent=5 // pred_check_branch
        %146 = sbr.rel (%p144) target = $region24
      $region23: #{tpu_custom_call.1} parent=5 // pred_region
        // Predicated region
        $region25: #{tpu_custom_call.1} parent=23 // pred_check
          %p147 = pneg %p46
        $region26: #{tpu_custom_call.1} parent=23 // pred_check_branch
          %149 = sbr.rel (%p147) target = $region28
        $region27: #{tpu_custom_call.1} parent=23 // pred_region
          %s150 = sand.u32 %s36, 1
          %s151 = scalar_lea.sflag [#allocation3], %s150
          %s152 = sand.u32 %s36, 1
          %s153 = smul.addr %s152, 8
          %s154 = scalar_lea.vmem [#allocation2], %s153
          %s155 = smul.u32 2, %s20
          %s157 = ssub.s32 128, 128
          %158 = vsyncadd %s151, %s157
          %s159 = smul.addr %s19, 2
          %s160 = sadd.s32 %s155, %s159
          %s161 = smul.addr %s160, 64
          %s162 = scalar_lea.hbm %s0, %s161
          %s164 = sshll.u32 %s154, 4
          %s165 = int_to_ptr.vmem [resolvable:$true] %s164
          %167 = dma.hbm_to_vmem [thread:$0]  %s162, 128, %s165, %s151
        $region28: #{tpu_custom_call.1} parent=23 // pred_fallthru
          _
      $region24: #{tpu_custom_call.1} parent=5 // pred_fallthru
        _
      %p168 = scmp.le.s32.totalorder 1, %s12
      %p169 = scmp.lt.s32.totalorder %s12, 3
      %p170 = pnand %p168, %p169
      %p171 = pneg %p170
      // Predicated region
      $region29: #{tpu_custom_call.1} parent=5 // pred_check
        _
      $region30: #{tpu_custom_call.1} parent=5 // pred_check_branch
        %173 = sbr.rel (%p170) target = $region32
      $region31: #{tpu_custom_call.1} parent=5 // pred_region
        %s174 = ssub.s32 %s12, 1
        %s175 = sand.u32 %s39, 1
        %s176 = scalar_lea.sflag [#allocation3], %s175
        %s177 = sand.u32 %s39, 1
        %s178 = smul.addr %s177, 8
        %s179 = scalar_lea.vmem [#allocation2], %s178
        // Predicated region
        $region33: #{tpu_custom_call.1} parent=31 // pred_check
          %p180 = pneg %p52
        $region34: #{tpu_custom_call.1} parent=31 // pred_check_branch
          %182 = sbr.rel (%p180) target = $region36
        $region35: #{tpu_custom_call.1} parent=31 // pred_region
          %183 = dma.done %s176, 128
        $region36: #{tpu_custom_call.1} parent=31 // pred_fallthru
          _
        %s184 = sand.u32 %s39, 1
        %s185 = scalar_lea.sflag [#allocation3], %s184
        %s186 = sand.u32 %s39, 1
        %s187 = smul.addr %s186, 8
        %s188 = scalar_lea.vmem [#allocation2], %s187
        %p189 = pneg %p52
        %p190 = pneg %p49
        %p191 = pneg %p73
        %p192 = pneg %p70
        %p193 = pneg %p94
        %p194 = pneg %p91
        %p195 = pneg %p122
        %p196 = pneg %p119
        %s197 = smul.u32 2, %s22
        %p198 = scmp.lt.s32.totalorder %s21, 1
        %s199 = scalar_select %p198, %s21, 1
        %p200 = scmp.lt.s32.totalorder %s197, 1
        %s201 = scalar_select %p200, %s197, 1
        %s202 = smul.addr %s199, 2
        %s203 = sadd.s32 %s201, %s202
        %s204 = smul.addr %s203, 4
        %s205 = scalar_lea.vmem %s3, %s204
        %s206 = smul.u32 2, %s22
        %s207 = smul.u32 2, %s22
        %p208 = scmp.lt.s32.totalorder %s21, 1
        %s209 = scalar_select %p208, %s21, 1
        %p210 = scmp.lt.s32.totalorder %s207, 1
        %s211 = scalar_select %p210, %s207, 1
        %s212 = smul.addr %s209, 2
        %s213 = sadd.s32 %s211, %s212
        %s214 = smul.addr %s213, 4
        %s215 = scalar_lea.vmem %s3, %s214
        %s216 = smul.u32 2, %s22
        %v217 = vld [vmem:[%s179] sm:$0xff]
        %v218 = vld [vmem:[%s1] sm:$0x7]
        %220 = vset.pattern.permute.xlu0 0
        %221 = vperm.xlu0 %220, %v218
        %v222 = vpop.permute.xlu0 %221
        %v225 = vlaneseq
        %v226 = vshrl.u32 %v225, 7
        %v227 = vsub.s32 0, %v226
        %v228 = vrot.slane %v217, %v227
        %v229 = vlaneseq
        %v230 = vshrl.u32 %v229, 7
        %v231 = vsub.s32 4, %v230
        %v232 = vrot.slane %v217, %v231
        %v235 = vlaneseq
        %v236 = vshrl.u32 %v235, 7
        %v237 = vsub.s32 0, %v236
        %v238 = vrot.slane %v228, %v237
        %v239 = vlaneseq
        %v240 = vshrl.u32 %v239, 7
        %v241 = vsub.s32 0, %v240
        %v242 = vrot.slane %v232, %v241
        %v243 = vmul.f32 %v222, %v238
        %v244 = vmul.f32 %v222, %v242
        %245 = vset.pattern.permute.xlu0 1
        %246 = vperm.xlu0 %245, %v218
        %v247 = vpop.permute.xlu0 %246
        %v249 = vlaneseq
        %v250 = vshrl.u32 %v249, 7
        %v251 = vsub.s32 1, %v250
        %v252 = vrot.slane %v217, %v251
        %v253 = vlaneseq
        %v254 = vshrl.u32 %v253, 7
        %v255 = vsub.s32 5, %v254
        %v256 = vrot.slane %v217, %v255
        %v259 = vlaneseq
        %v260 = vshrl.u32 %v259, 7
        %v261 = vsub.s32 1, %v260
        %v262 = vrot.slane %v252, %v261
        %v263 = vlaneseq
        %v264 = vshrl.u32 %v263, 7
        %v265 = vsub.s32 1, %v264
        %v266 = vrot.slane %v256, %v265
        %v267 = vmul.f32 %v247, %v262
        %v268 = vmul.f32 %v247, %v266
        %v269 = vadd.f32 %v243, %v267
        %v270 = vadd.f32 %v244, %v268
        %271 = vset.pattern.permute.xlu0 2
        %272 = vperm.xlu0 %271, %v218
        %v273 = vpop.permute.xlu0 %272
        %v275 = vlaneseq
        %v276 = vshrl.u32 %v275, 7
        %v277 = vsub.s32 2, %v276
        %v278 = vrot.slane %v217, %v277
        %v279 = vlaneseq
        %v280 = vshrl.u32 %v279, 7
        %v281 = vsub.s32 6, %v280
        %v282 = vrot.slane %v217, %v281
        %v285 = vlaneseq
        %v286 = vshrl.u32 %v285, 7
        %v287 = vsub.s32 2, %v286
        %v288 = vrot.slane %v278, %v287
        %v289 = vlaneseq
        %v290 = vshrl.u32 %v289, 7
        %v291 = vsub.s32 2, %v290
        %v292 = vrot.slane %v282, %v291
        %v293 = vmul.f32 %v273, %v288
        %v294 = vmul.f32 %v273, %v292
        %v295 = vadd.f32 %v269, %v293
        %v296 = vadd.f32 %v270, %v294
        %297 = vset.pattern.permute.xlu0 3
        %298 = vperm.xlu0 %297, %v218
        %v299 = vpop.permute.xlu0 %298
        %v301 = vlaneseq
        %v302 = vshrl.u32 %v301, 7
        %v303 = vsub.s32 3, %v302
        %v304 = vrot.slane %v217, %v303
        %v305 = vlaneseq
        %v306 = vshrl.u32 %v305, 7
        %v307 = vsub.s32 7, %v306
        %v308 = vrot.slane %v217, %v307
        %v311 = vlaneseq
        %v312 = vshrl.u32 %v311, 7
        %v313 = vsub.s32 3, %v312
        %v314 = vrot.slane %v304, %v313
        %v315 = vlaneseq
        %v316 = vshrl.u32 %v315, 7
        %v317 = vsub.s32 3, %v316
        %v318 = vrot.slane %v308, %v317
        %v319 = vmul.f32 %v299, %v314
        %v320 = vmul.f32 %v299, %v318
        %v321 = vadd.f32 %v295, %v319
        %v322 = vadd.f32 %v296, %v320
        %v323 = vld [vmem:[%s2] sm:$0x7]
        %325 = vset.pattern.permute.xlu0 0
        %326 = vperm.xlu0 %325, %v323
        %v327 = vpop.permute.xlu0 %326
        %v329 = vadd.f32 %v321, %v327
        %v330 = vadd.f32 %v322, %v327
        %v333 = vcombine.low %v329, %v330
        %335 = vst [vmem:[%s215] sm:$0x77] %v333
        %s336 = smul.u32 2, %s22
        %p337 = scmp.lt.s32.totalorder %s21, 1
        %s338 = scalar_select %p337, %s21, 1
        %p339 = scmp.lt.s32.totalorder %s336, 1
        %s340 = scalar_select %p339, %s336, 1
        %s341 = smul.addr %s338, 2
        %s342 = sadd.s32 %s340, %s341
        %s343 = smul.addr %s342, 4
        %s344 = scalar_lea.vmem %s3, %s343
        // Predicated region
        $region37: #{tpu_custom_call.1} parent=31 // pred_check
          %p345 = pneg %p119
        $region38: #{tpu_custom_call.1} parent=31 // pred_check_branch
          %347 = sbr.rel (%p345) target = $region40
        $region39: #{tpu_custom_call.1} parent=31 // pred_region
          %s348 = smul.u32 2, %s22
        $region40: #{tpu_custom_call.1} parent=31 // pred_fallthru
          _
      $region32: #{tpu_custom_call.1} parent=5 // pred_fallthru
        _
      %p349 = scmp.le.s32.totalorder 2, %s12
      // Predicated region
      $region41: #{tpu_custom_call.1} parent=5 // pred_check
        %p350 = pneg %p349
      $region42: #{tpu_custom_call.1} parent=5 // pred_check_branch
        %352 = sbr.rel (%p350) target = $region44
      $region43: #{tpu_custom_call.1} parent=5 // pred_region
        %s353 = ssub.s32 %s12, 2
        // Predicated region
        $region45: #{tpu_custom_call.1} parent=43 // pred_check
          %p354 = pneg %p125
        $region46: #{tpu_custom_call.1} parent=43 // pred_check_branch
          %356 = sbr.rel (%p354) target = $region48
        $region47: #{tpu_custom_call.1} parent=43 // pred_region
          %s357 = smul.u32 2, %s24
          %p358 = scmp.lt.s32.totalorder %s23, 1
          %s359 = scalar_select %p358, %s23, 1
          %p360 = scmp.lt.s32.totalorder %s357, 1
          %s361 = scalar_select %p360, %s357, 1
          %s362 = smul.addr %s359, 2
          %s363 = sadd.s32 %s361, %s362
          %s364 = smul.addr %s363, 4
          %s365 = scalar_lea.vmem %s3, %s364
        $region48: #{tpu_custom_call.1} parent=43 // pred_fallthru
          _
      $region44: #{tpu_custom_call.1} parent=5 // pred_fallthru
        _
    $region6: #{tpu_custom_call.1} parent=1 // loop_footer
      %s16 = sadd.s32 1, %s12
    $region7: #{tpu_custom_call.1} parent=1 // loop_footer_branch
      %11 = sbr.rel target = $region3
    $region8: #{tpu_custom_call.1} parent=1 // loop_exit
      _
    %366 = vsyncpa [#allocation3], 1
    %s367 = scalar_lea.sflag [#allocation3], 1
    %368 = vsyncpa %s367, 1

</llo_original>
